<compile_context>
chip_gen: v7x
topology: tpu7x:2x2x1
jax: 0.10.0
libtpu: 0.0.40
codegen_flags: <defaults>
</compile_context>

<pallas_src>
import functools

import jax
import jax.numpy as jnp
from jax.experimental import pallas as pl
from jax.experimental.pallas import tpu as pltpu

# ---- model hyper-params (small stand-in, consistent with the module) -------
HIDDEN = 32           # wav2vec hidden_size (stand-in; real model uses 768)
MID = 256             # classifier1 output width (nn.Linear(hidden, 256))
NUM_CLASSES = 1       # default num_classes in the module
FRAME = 16            # samples per frame for the stand-in feature extractor
GROUP = 8             # frames packed per lane-dense row
PACK = FRAME * GROUP  # 128 -> one full lane dimension per packed row
LANE = 128            # padded logits width (lane-dense output block)
B_TILE = 8            # batch rows per grid step (sublane-aligned)


def _round_up(x, m):
    return ((x + m - 1) // m) * m


def _wav2vec_classifier_kernel(x_ref, wbig_ref, b1_ref, w2_ref, b2_ref,
                               out_ref, acc_ref, *, inv_t):
    """Pooled-sum accumulation over time tiles + fused MLP head at the end."""
    ti = pl.program_id(1)

    @pl.when(ti == 0)
    def _():
        acc_ref[...] = jnp.zeros_like(acc_ref)

    # Accumulate the pooled sum over time: sublane reduction of a lane-dense
    # [B_TILE, T_TILE, 128] block, accumulated in f32.
    acc_ref[...] += jnp.sum(x_ref[...].astype(jnp.float32), axis=1)

    @pl.when(ti == pl.num_programs(1) - 1)
    def _():
        # Mean over the *original* frame count; zero-padded frames add 0.
        pooled = acc_ref[...] * inv_t                                # [Bt, 128]
        # classifier1 fused with the linear backbone projection:
        #   h1 = mean(frames) @ (w_feat @ w1) + b1     (single MXU pass, K=128)
        h1 = jnp.dot(pooled.astype(jnp.bfloat16), wbig_ref[...],
                     preferred_element_type=jnp.float32) + b1_ref[...]
        h1 = jnp.maximum(h1, 0.0)                                    # ReLU
        # Dropout(p=0.1) is identity at inference time.
        # classifier2 with output padded to 128 lanes -> unmasked lane-dense store.
        logits = jnp.dot(h1.astype(jnp.bfloat16), w2_ref[...],
                         preferred_element_type=jnp.float32) + b2_ref[...]
        out_ref[...] = logits.astype(out_ref.dtype)


def init_params(key):
    """Deterministic parameter init (shapes from the module __init__)."""
    k_f, k_w1, k_b1, k_w2, k_b2 = jax.random.split(key, 5)
    return {
        # stand-in wav2vec feature projection
        "w_feat": jax.random.normal(k_f, (FRAME, HIDDEN), jnp.float32) * 0.1,
        # classifier1: Linear(hidden_size, 256)
        "w1": jax.random.normal(k_w1, (HIDDEN, MID), jnp.float32) * (1.0 / HIDDEN ** 0.5),
        "b1": jax.random.normal(k_b1, (1, MID), jnp.float32) * 0.01,
        # classifier2: Linear(256, num_classes)
        "w2": jax.random.normal(k_w2, (MID, NUM_CLASSES), jnp.float32) * (1.0 / MID ** 0.5),
        "b2": jax.random.normal(k_b2, (1, NUM_CLASSES), jnp.float32) * 0.01,
    }


@functools.partial(jax.jit, static_argnames="t_tile")
def wav2vec_classifier_forward(input_values, params, *, t_tile=256):
    """input_values: [B, L] waveform -> logits [B, NUM_CLASSES]."""
    B, L = input_values.shape
    T = L // FRAME                       # frames used by the stand-in encoder
    assert T > 0, "waveform shorter than one frame"

    # ---- wrapper-side layout plumbing (lane-dense packing + zero padding) ---
    t_tile = max(8, _round_up(t_tile, 8))
    tb_needed = -(-T // GROUP)           # packed 128-wide rows with real frames
    t_tile_eff = t_tile if tb_needed >= t_tile else _round_up(tb_needed, 8)
    TB = _round_up(tb_needed, t_tile_eff)
    B_pad = _round_up(B, B_TILE)

    x = input_values[:, : T * FRAME].astype(jnp.bfloat16)
    x = jnp.pad(x, ((0, B_pad - B), (0, TB * PACK - T * FRAME)))
    x_packed = x.reshape(B_pad, TB, PACK)                    # [B_pad, TB, 128]

    # ---- wrapper-side weight fusion (exact only for the linear stand-in) ----
    w_fused = jnp.dot(params["w_feat"], params["w1"])        # [FRAME, MID]
    w_big = jnp.tile(w_fused, (GROUP, 1)).astype(jnp.bfloat16)   # [128, MID]
    b1 = params["b1"].astype(jnp.float32)                    # [1, MID]
    w2_pad = jnp.zeros((MID, LANE), jnp.bfloat16).at[:, :NUM_CLASSES].set(
        params["w2"].astype(jnp.bfloat16))                   # [256, 128]
    b2_pad = jnp.zeros((1, LANE), jnp.float32).at[:, :NUM_CLASSES].set(
        params["b2"].astype(jnp.float32))                    # [1, 128]

    grid = (B_pad // B_TILE, TB // t_tile_eff)
    kernel = functools.partial(_wav2vec_classifier_kernel, inv_t=1.0 / T)

    out_pad = pl.pallas_call(
        kernel,
        out_shape=jax.ShapeDtypeStruct((B_pad, LANE), jnp.float32),
        grid=grid,
        in_specs=[
            # waveform tiles: double-buffered HBM->VMEM pipeline
            pl.BlockSpec((B_TILE, t_tile_eff, PACK), lambda bi, ti: (bi, ti, 0)),
            # small head weights: constant block index -> fetched once, resident
            pl.BlockSpec((PACK, MID), lambda bi, ti: (0, 0)),
            pl.BlockSpec((1, MID), lambda bi, ti: (0, 0)),
            pl.BlockSpec((MID, LANE), lambda bi, ti: (0, 0)),
            pl.BlockSpec((1, LANE), lambda bi, ti: (0, 0)),
        ],
        out_specs=pl.BlockSpec((B_TILE, LANE), lambda bi, ti: (bi, 0)),
        scratch_shapes=[pltpu.VMEM((B_TILE, LANE), jnp.float32)],
        compiler_params=pltpu.CompilerParams(
            dimension_semantics=("parallel", "arbitrary"),
            vmem_limit_bytes=32 * 1024 * 1024),
    )(x_packed, w_big, b1, w2_pad, b2_pad)

    # slice away batch/lane padding
    return out_pad[:B, :NUM_CLASSES]


if __name__ == "__main__":
    key = jax.random.PRNGKey(0)
    k_params, k_x = jax.random.split(key)

    params = init_params(k_params)

    B, L = 2, 2048                      # small waveform: [Batch, SequenceLength]
    input_values = jax.random.normal(k_x, (B, L), jnp.float32)

    # small t_tile so the demo exercises the multi-step accumulation pipeline
    logits = wav2vec_classifier_forward(input_values, params, t_tile=8)
    jax.block_until_ready(logits)
    assert logits.shape == (B, NUM_CLASSES)

    # pure-JAX reference of the same stand-in forward (un-fused ordering)
    frames = input_values[:, : (L // FRAME) * FRAME].reshape(B, -1, FRAME)
    hidden = jnp.einsum("btf,fh->bth", frames, params["w_feat"])
    pooled = jnp.mean(hidden, axis=1)
    h1 = jnp.maximum(pooled @ params["w1"] + params["b1"], 0.0)
    ref = h1 @ params["w2"] + params["b2"]
    assert jnp.allclose(logits, ref, rtol=5e-2, atol=5e-2)

    print("KERNEL_OK")
</pallas_src>

<mosaic_0001>
module attributes {stable_mosaic.version = 11 : i64} {
  func.func @_wav2vec_classifier_kernel(%arg0: i32, %arg1: i32, %arg2: memref<8x8x128xbf16, #tpu.memory_space<vmem>>, %arg3: memref<128x256xbf16, #tpu.memory_space<vmem>>, %arg4: memref<1x256xf32, #tpu.memory_space<vmem>>, %arg5: memref<256x128xbf16, #tpu.memory_space<vmem>>, %arg6: memref<1x128xf32, #tpu.memory_space<vmem>>, %arg7: memref<8x128xf32, #tpu.memory_space<vmem>>, %arg8: memref<8x128xf32, #tpu.memory_space<vmem>>) attributes {dimension_semantics = [#tpu.dimension_semantics<parallel>, #tpu.dimension_semantics<arbitrary>], iteration_bounds = array<i64: 1, 2>, scalar_prefetch = 0 : i64, scratch_operands = 1 : i64, tpu.core_type = #tpu.core_type<tc>, window_params = [{transform_indices = @transform_0, window_bounds = array<i64: 8, 8, 128>}, {pipeline_mode = #tpu.pipeline_mode<synchronous>, transform_indices = @transform_1, window_bounds = array<i64: 128, 256>}, {pipeline_mode = #tpu.pipeline_mode<synchronous>, transform_indices = @transform_2, window_bounds = array<i64: 1, 256>}, {pipeline_mode = #tpu.pipeline_mode<synchronous>, transform_indices = @transform_3, window_bounds = array<i64: 256, 128>}, {pipeline_mode = #tpu.pipeline_mode<synchronous>, transform_indices = @transform_4, window_bounds = array<i64: 1, 128>}, {transform_indices = @transform_5, window_bounds = array<i64: 8, 128>}]} {
    %c0_i32 = arith.constant 0 : i32
    %0 = arith.cmpi eq, %arg1, %c0_i32 : i32
    %1 = arith.extui %0 : i1 to i32
    %c0_i32_0 = arith.constant 0 : i32
    %2 = arith.cmpi ne, %1, %c0_i32_0 : i32
    scf.if %2 {
      %cst_8 = arith.constant 0.000000e+00 : f32
      %12 = vector.broadcast %cst_8 : f32 to vector<8x128xf32>
      %c0_9 = arith.constant 0 : index
      %c0_10 = arith.constant 0 : index
      %13 = vector.load %arg8[%c0_9, %c0_10] : memref<8x128xf32, #tpu.memory_space<vmem>>, vector<8x128xf32>
      tpu.vector_store %arg8[%c0_9, %c0_10], %12 {strides = array<i32>} : memref<8x128xf32, #tpu.memory_space<vmem>>, vector<8x128xf32>,
    } else {
    }
    %c0 = arith.constant 0 : index
    %c0_1 = arith.constant 0 : index
    %3 = vector.load %arg8[%c0, %c0_1] : memref<8x128xf32, #tpu.memory_space<vmem>>, vector<8x128xf32>
    %c0_2 = arith.constant 0 : index
    %c0_3 = arith.constant 0 : index
    %c0_4 = arith.constant 0 : index
    %4 = vector.load %arg2[%c0_2, %c0_3, %c0_4] : memref<8x8x128xbf16, #tpu.memory_space<vmem>>, vector<8x8x128xbf16>
    %5 = arith.extf %4 : vector<8x8x128xbf16> to vector<8x8x128xf32>
    %cst = arith.constant dense<0.000000e+00> : vector<8x128xf32>
    %6 = vector.multi_reduction <add>, %5, %cst [1] : vector<8x8x128xf32> to vector<8x128xf32>
    %7 = arith.addf %3, %6 : vector<8x128xf32>
    %c0_5 = arith.constant 0 : index
    %c0_6 = arith.constant 0 : index
    %8 = vector.load %arg8[%c0_5, %c0_6] : memref<8x128xf32, #tpu.memory_space<vmem>>, vector<8x128xf32>
    tpu.vector_store %arg8[%c0_5, %c0_6], %7 {strides = array<i32>} : memref<8x128xf32, #tpu.memory_space<vmem>>, vector<8x128xf32>,
    %c1_i32 = arith.constant 1 : i32
    %9 = arith.cmpi eq, %arg1, %c1_i32 : i32
    %10 = arith.extui %9 : i1 to i32
    %c0_i32_7 = arith.constant 0 : i32
    %11 = arith.cmpi ne, %10, %c0_i32_7 : i32
    scf.if %11 {
      %c0_8 = arith.constant 0 : index
      %c0_9 = arith.constant 0 : index
      %12 = vector.load %arg8[%c0_8, %c0_9] : memref<8x128xf32, #tpu.memory_space<vmem>>, vector<8x128xf32>
      %cst_10 = arith.constant 7.812500e-03 : f32
      %13 = vector.broadcast %cst_10 : f32 to vector<8x128xf32>
      %14 = arith.mulf %12, %13 : vector<8x128xf32>
      %15 = arith.truncf %14 : vector<8x128xf32> to vector<8x128xbf16>
      %c0_11 = arith.constant 0 : index
      %c0_12 = arith.constant 0 : index
      %16 = vector.load %arg3[%c0_11, %c0_12] : memref<128x256xbf16, #tpu.memory_space<vmem>>, vector<128x256xbf16>
      %cst_13 = arith.constant dense<0.000000e+00> : vector<8x256xf32>
      %17 = tpu.matmul %15, %16, %cst_13 {dimension_numbers = #tpu.dot_dimension_numbers<[1], [0], [0], [1], [0, 0, 1, 1], [], []>} : vector<8x128xbf16>, vector<128x256xbf16>, vector<8x256xf32> -> vector<8x256xf32>
      %c0_14 = arith.constant 0 : index
      %c0_15 = arith.constant 0 : index
      %18 = vector.load %arg4[%c0_14, %c0_15] : memref<1x256xf32, #tpu.memory_space<vmem>>, vector<1x256xf32>
      %19 = vector.broadcast %18 : vector<1x256xf32> to vector<8x256xf32>
      %20 = arith.addf %17, %19 : vector<8x256xf32>
      %cst_16 = arith.constant 0.000000e+00 : f32
      %21 = vector.broadcast %cst_16 : f32 to vector<8x256xf32>
      %22 = arith.maximumf %20, %21 : vector<8x256xf32>
      %23 = arith.truncf %22 : vector<8x256xf32> to vector<8x256xbf16>
      %c0_17 = arith.constant 0 : index
      %c0_18 = arith.constant 0 : index
      %24 = vector.load %arg5[%c0_17, %c0_18] : memref<256x128xbf16, #tpu.memory_space<vmem>>, vector<256x128xbf16>
      %cst_19 = arith.constant dense<0.000000e+00> : vector<8x128xf32>
      %25 = tpu.matmul %23, %24, %cst_19 {dimension_numbers = #tpu.dot_dimension_numbers<[1], [0], [0], [1], [0, 0, 1, 1], [], []>} : vector<8x256xbf16>, vector<256x128xbf16>, vector<8x128xf32> -> vector<8x128xf32>
      %c0_20 = arith.constant 0 : index
      %c0_21 = arith.constant 0 : index
      %26 = vector.load %arg6[%c0_20, %c0_21] : memref<1x128xf32, #tpu.memory_space<vmem>>, vector<1x128xf32>
      %27 = vector.broadcast %26 : vector<1x128xf32> to vector<8x128xf32>
      %28 = arith.addf %25, %27 : vector<8x128xf32>
      %c0_22 = arith.constant 0 : index
      %c0_23 = arith.constant 0 : index
      %29 = vector.load %arg7[%c0_22, %c0_23] : memref<8x128xf32, #tpu.memory_space<vmem>>, vector<8x128xf32>
      tpu.vector_store %arg7[%c0_22, %c0_23], %28 {strides = array<i32>} : memref<8x128xf32, #tpu.memory_space<vmem>>, vector<8x128xf32>,
    } else {
    }
    return
  }
  func.func @transform_0(%arg0: i32, %arg1: i32) -> (i32, i32, i32) {
    %c0_i32 = arith.constant 0 : i32
    %c0_i32_0 = arith.constant 0 : i32
    return %arg0, %arg1, %c0_i32 : i32, i32, i32
  }
  func.func @transform_1(%arg0: i32, %arg1: i32) -> (i32, i32) {
    %c0_i32 = arith.constant 0 : i32
    %c0_i32_0 = arith.constant 0 : i32
    %c0_i32_1 = arith.constant 0 : i32
    return %c0_i32, %c0_i32_0 : i32, i32
  }
  func.func @transform_2(%arg0: i32, %arg1: i32) -> (i32, i32) {
    %c0_i32 = arith.constant 0 : i32
    %c0_i32_0 = arith.constant 0 : i32
    %c0_i32_1 = arith.constant 0 : i32
    return %c0_i32, %c0_i32_0 : i32, i32
  }
  func.func @transform_3(%arg0: i32, %arg1: i32) -> (i32, i32) {
    %c0_i32 = arith.constant 0 : i32
    %c0_i32_0 = arith.constant 0 : i32
    %c0_i32_1 = arith.constant 0 : i32
    return %c0_i32, %c0_i32_0 : i32, i32
  }
  func.func @transform_4(%arg0: i32, %arg1: i32) -> (i32, i32) {
    %c0_i32 = arith.constant 0 : i32
    %c0_i32_0 = arith.constant 0 : i32
    %c0_i32_1 = arith.constant 0 : i32
    return %c0_i32, %c0_i32_0 : i32, i32
  }
  func.func @transform_5(%arg0: i32, %arg1: i32) -> (i32, i32) {
    %c0_i32 = arith.constant 0 : i32
    %c0_i32_0 = arith.constant 0 : i32
    return %arg0, %c0_i32 : i32, i32
  }
}

</mosaic_0001>

<llo_original>
// kernel: wav2vec_classifier_forward.1
$region0: #{wav2vec_classifier_forward.1}
  #allocation0 [shape = 'u32[]', space=smem, size = 0x4, offset = 0x4, fixed_abs, tag = 'smem constant byte address 0x4 - core index']
  #allocation1 [shape = 'u32[144,128]{1,0:T(1,128)}', space=vmem, size = 0x12000, scoped, tag = 'internal scratch']
  #allocation2 [shape = 'f32[8,128]{1,0:T(8,128)}', space=vmem, size = 0x1000, scoped, tag = 'scratch operand']
  %s0 = inlined_call_operand.vmem [shape: bf16[8,16,128], index: 0, kind: input, shape index: {}]
  %s1 = inlined_call_operand.vmem [shape: bf16[128,256], index: 1, kind: input, shape index: {}]
  %s2 = inlined_call_operand.vmem [shape: f32[1,256], index: 2, kind: input, shape index: {}]
  %s3 = inlined_call_operand.vmem [shape: bf16[256,128], index: 3, kind: input, shape index: {}]
  %s4 = inlined_call_operand.vmem [shape: f32[1,128], index: 4, kind: input, shape index: {}]
  %s5 = inlined_call_operand.vmem [shape: f32[8,128], index: 5, kind: output, shape index: {}]
  %s6 = sld [smem:[#allocation0]]
  $region102: #{wav2vec_classifier_forward.1} parent=0
    _
  %s8 = ssub.s32 1, %s6
  %s9 = scalar_select 0, %s8, %s6
  $region1: #{wav2vec_classifier_forward.1} parent=0
    #allocation3 [shape = 'u8[32768]{0}', space=vmem, size = 0x8000, scoped, tag = 'input window, operand 0']
    loop: start=0, step=1, limit=4
    $region2: #{wav2vec_classifier_forward.1} parent=1 // loop_pre_header
      _
    $region3: #{wav2vec_classifier_forward.1} parent=1 // loop_header
      %s11 = sphi 0, %s15
      %p12 = scmp.ge.s32.totalorder %s11, 4
      %s18 = sphi 0, %s30
      %s19 = sphi 0, %s26
      %s20 = sphi 0, %s18
      %s21 = sphi 0, %s19
      %s22 = sphi 0, %s20
      %s23 = sphi 0, %s21
      %s35 = sphi 0, %s37
      %s38 = sphi 0, %s35
      %s39 = sphi 0, %s38
      %s55 = sphi 0, %s39
      %s59 = sphi 0, %s59
      %s61 = sphi 0, %s59
      %s62 = sphi 0, %s61
      %s76 = sphi 0, %s62
      %s80 = sphi 0, %s80
      %s82 = sphi 0, %s80
      %s83 = sphi 0, %s82
      %s97 = sphi 0, %s83
      %s101 = sphi 0, %s101
      %s103 = sphi 0, %s101
      %s104 = sphi 0, %s103
      %s118 = sphi 0, %s104
      %s122 = sphi 0, %s122
      %s124 = sphi 0, %s122
      %s125 = sphi 0, %s124
      %s139 = sphi 0, %s125
      %s145 = sphi 0, %s147
      %s148 = sphi 0, %s145
      %s149 = sphi 0, %s148
      %s165 = sphi 0, %s149
    $region4: #{wav2vec_classifier_forward.1} parent=1 // loop_header_branch
      %14 = sbr.rel (%p12) target = $region8
    $region5: #{wav2vec_classifier_forward.1} parent=1 // loop_body
      %s16 = ssub.s32 %s11, 1
      %s17 = ssub.s32 %s11, 2
      %s24 = sadd.s32 1, %s19
      %p25 = scmp.ge.s32.totalorder %s24, 2
      %s26 = scalar_select %p25, 0, %s24
      %s27 = sadd.s32 1, %s18
      %s28 = scalar_select %p25, %s27, %s18
      %p29 = scmp.ge.s32.totalorder %s28, 1
      %s30 = scalar_select %p29, 0, %s28
      %s31 = ssub.s32 %s18, %s30
      %s32 = ssub.s32 %s19, %s26
      %s33 = sor.u32 %s31, %s32
      %p34 = scmp.eq.s32.totalorder %s33, 0
      %s36 = sadd.s32 %s35, 1
      %s37 = scalar_select %p34, %s35, %s36
      %p40 = pneg %p34
      %p41 = scmp.eq.s32.totalorder %s11, 1
      %p42 = por %p40, %p41
      %p43 = scmp.ne.s32.totalorder %s35, %s38
      %p44 = scmp.eq.s32.totalorder %s11, 0
      %p45 = por %p43, %p44
      %p46 = scmp.ne.s32.totalorder %s35, %s38
      %p47 = scmp.eq.s32.totalorder %s16, 1
      %p48 = por %p46, %p47
      %p49 = scmp.ne.s32.totalorder %s38, %s39
      %p50 = scmp.eq.s32.totalorder %s16, 0
      %p51 = por %p49, %p50
      %p52 = scmp.ne.s32.totalorder %s38, %s39
      %p53 = scmp.eq.s32.totalorder %s17, 1
      %p54 = por %p52, %p53
      %p56 = scmp.ne.s32.totalorder %s39, %s55
      %p57 = scmp.eq.s32.totalorder %s17, 0
      %p58 = por %p56, %p57
      %s60 = sadd.s32 %s59, 1
      %p63 = scmp.eq.s32.totalorder %s11, 1
      %p64 = scmp.ne.s32.totalorder %s59, %s61
      %p65 = scmp.eq.s32.totalorder %s11, 0
      %p66 = por %p64, %p65
      %p67 = scmp.ne.s32.totalorder %s59, %s61
      %p68 = scmp.eq.s32.totalorder %s16, 1
      %p69 = por %p67, %p68
      %p70 = scmp.ne.s32.totalorder %s61, %s62
      %p71 = scmp.eq.s32.totalorder %s16, 0
      %p72 = por %p70, %p71
      %p73 = scmp.ne.s32.totalorder %s61, %s62
      %p74 = scmp.eq.s32.totalorder %s17, 1
      %p75 = por %p73, %p74
      %p77 = scmp.ne.s32.totalorder %s62, %s76
      %p78 = scmp.eq.s32.totalorder %s17, 0
      %p79 = por %p77, %p78
      %s81 = sadd.s32 %s80, 1
      %p84 = scmp.eq.s32.totalorder %s11, 1
      %p85 = scmp.ne.s32.totalorder %s80, %s82
      %p86 = scmp.eq.s32.totalorder %s11, 0
      %p87 = por %p85, %p86
      %p88 = scmp.ne.s32.totalorder %s80, %s82
      %p89 = scmp.eq.s32.totalorder %s16, 1
      %p90 = por %p88, %p89
      %p91 = scmp.ne.s32.totalorder %s82, %s83
      %p92 = scmp.eq.s32.totalorder %s16, 0
      %p93 = por %p91, %p92
      %p94 = scmp.ne.s32.totalorder %s82, %s83
      %p95 = scmp.eq.s32.totalorder %s17, 1
      %p96 = por %p94, %p95
      %p98 = scmp.ne.s32.totalorder %s83, %s97
      %p99 = scmp.eq.s32.totalorder %s17, 0
      %p100 = por %p98, %p99
      %s102 = sadd.s32 %s101, 1
      %p105 = scmp.eq.s32.totalorder %s11, 1
      %p106 = scmp.ne.s32.totalorder %s101, %s103
      %p107 = scmp.eq.s32.totalorder %s11, 0
      %p108 = por %p106, %p107
      %p109 = scmp.ne.s32.totalorder %s101, %s103
      %p110 = scmp.eq.s32.totalorder %s16, 1
      %p111 = por %p109, %p110
      %p112 = scmp.ne.s32.totalorder %s103, %s104
      %p113 = scmp.eq.s32.totalorder %s16, 0
      %p114 = por %p112, %p113
      %p115 = scmp.ne.s32.totalorder %s103, %s104
      %p116 = scmp.eq.s32.totalorder %s17, 1
      %p117 = por %p115, %p116
      %p119 = scmp.ne.s32.totalorder %s104, %s118
      %p120 = scmp.eq.s32.totalorder %s17, 0
      %p121 = por %p119, %p120
      %s123 = sadd.s32 %s122, 1
      %p126 = scmp.eq.s32.totalorder %s11, 1
      %p127 = scmp.ne.s32.totalorder %s122, %s124
      %p128 = scmp.eq.s32.totalorder %s11, 0
      %p129 = por %p127, %p128
      %p130 = scmp.ne.s32.totalorder %s122, %s124
      %p131 = scmp.eq.s32.totalorder %s16, 1
      %p132 = por %p130, %p131
      %p133 = scmp.ne.s32.totalorder %s124, %s125
      %p134 = scmp.eq.s32.totalorder %s16, 0
      %p135 = por %p133, %p134
      %p136 = scmp.ne.s32.totalorder %s124, %s125
      %p137 = scmp.eq.s32.totalorder %s17, 1
      %p138 = por %p136, %p137
      %p140 = scmp.ne.s32.totalorder %s125, %s139
      %p141 = scmp.eq.s32.totalorder %s17, 0
      %p142 = por %p140, %p141
      %s143 = ssub.s32 %s18, %s30
      %p144 = scmp.eq.s32.totalorder %s143, 0
      %s146 = sadd.s32 %s145, 1
      %s147 = scalar_select %p144, %s145, %s146
      %p150 = pneg %p144
      %p151 = scmp.eq.s32.totalorder %s11, 1
      %p152 = por %p150, %p151
      %p153 = scmp.ne.s32.totalorder %s145, %s148
      %p154 = scmp.eq.s32.totalorder %s11, 0
      %p155 = por %p153, %p154
      %p156 = scmp.ne.s32.totalorder %s145, %s148
      %p157 = scmp.eq.s32.totalorder %s16, 1
      %p158 = por %p156, %p157
      %p159 = scmp.ne.s32.totalorder %s148, %s149
      %p160 = scmp.eq.s32.totalorder %s16, 0
      %p161 = por %p159, %p160
      %p162 = scmp.ne.s32.totalorder %s148, %s149
      %p163 = scmp.eq.s32.totalorder %s17, 1
      %p164 = por %p162, %p163
      %p166 = scmp.ne.s32.totalorder %s149, %s165
      %p167 = scmp.eq.s32.totalorder %s17, 0
      %p168 = por %p166, %p167
      %p169 = scmp.le.s32.totalorder 1, %s11
      %p170 = scmp.lt.s32.totalorder %s11, 3
      %p171 = pnand %p169, %p170
      %p172 = pneg %p171
      // Predicated region
      $region9: #{wav2vec_classifier_forward.1} parent=5 // pred_check
        _
      $region10: #{wav2vec_classifier_forward.1} parent=5 // pred_check_branch
        %174 = sbr.rel (%p171) target = $region12
      $region11: #{wav2vec_classifier_forward.1} parent=5 // pred_region
        %s175 = ssub.s32 %s11, 1
        // Predicated region
        $region13: #{wav2vec_classifier_forward.1} parent=11 // pred_check
          %p176 = pneg %p72
        $region14: #{wav2vec_classifier_forward.1} parent=11 // pred_check_branch
          %178 = sbr.rel (%p176) target = $region16
        $region15: #{wav2vec_classifier_forward.1} parent=11 // pred_region
          _
        $region16: #{wav2vec_classifier_forward.1} parent=11 // pred_fallthru
          _
        // Predicated region
        $region17: #{wav2vec_classifier_forward.1} parent=11 // pred_check
          %p179 = pneg %p93
        $region18: #{wav2vec_classifier_forward.1} parent=11 // pred_check_branch
          %181 = sbr.rel (%p179) target = $region20
        $region19: #{wav2vec_classifier_forward.1} parent=11 // pred_region
          _
        $region20: #{wav2vec_classifier_forward.1} parent=11 // pred_fallthru
          _
        // Predicated region
        $region21: #{wav2vec_classifier_forward.1} parent=11 // pred_check
          %p182 = pneg %p114
        $region22: #{wav2vec_classifier_forward.1} parent=11 // pred_check_branch
          %184 = sbr.rel (%p182) target = $region24
        $region23: #{wav2vec_classifier_forward.1} parent=11 // pred_region
          _
        $region24: #{wav2vec_classifier_forward.1} parent=11 // pred_fallthru
          _
        // Predicated region
        $region25: #{wav2vec_classifier_forward.1} parent=11 // pred_check
          %p185 = pneg %p135
        $region26: #{wav2vec_classifier_forward.1} parent=11 // pred_check_branch
          %187 = sbr.rel (%p185) target = $region28
        $region27: #{wav2vec_classifier_forward.1} parent=11 // pred_region
          _
        $region28: #{wav2vec_classifier_forward.1} parent=11 // pred_fallthru
          _
      $region12: #{wav2vec_classifier_forward.1} parent=5 // pred_fallthru
        _
      %p188 = scmp.lt.s32.totalorder %s11, 2
      // Predicated region
      $region29: #{wav2vec_classifier_forward.1} parent=5 // pred_check
        %p189 = pneg %p188
      $region30: #{wav2vec_classifier_forward.1} parent=5 // pred_check_branch
        %191 = sbr.rel (%p189) target = $region32
      $region31: #{wav2vec_classifier_forward.1} parent=5 // pred_region
        // Predicated region
        $region33: #{wav2vec_classifier_forward.1} parent=31 // pred_check
          %p192 = pneg %p45
        $region34: #{wav2vec_classifier_forward.1} parent=31 // pred_check_branch
          %194 = sbr.rel (%p192) target = $region36
        $region35: #{wav2vec_classifier_forward.1} parent=31 // pred_region
          %s195 = sand.u32 %s35, 1
          %s196 = sand.u32 %s35, 1
          %s197 = smul.addr %s196, 32
          %s198 = scalar_lea.vmem [#allocation3], %s197
          %s199 = smul.u32 8, %s18
          %s200 = smul.addr %s199, 2
          %s201 = sadd.s32 %s19, %s200
          %s202 = smul.addr %s201, 4
          %s203 = scalar_lea.vmem %s0, %s202
          // Predicated region
          $region37: #{wav2vec_classifier_forward.1} parent=35 // pred_check
            _
          $region38: #{wav2vec_classifier_forward.1} parent=35 // pred_check_branch
            %205 = sbr.rel (0) target = $region40
          $region39: #{wav2vec_classifier_forward.1} parent=35 // pred_region
            // Predicated region
            $region41: #{wav2vec_classifier_forward.1} parent=39 // pred_check
              _
            $region42: #{wav2vec_classifier_forward.1} parent=39 // pred_check_branch
              %207 = sbr.rel target = $region44
            $region43: #{wav2vec_classifier_forward.1} parent=39 // pred_region
              // Predicated region
              $region56: #{wav2vec_classifier_forward.1} parent=43 // pred_check
                _
              $region57: #{wav2vec_classifier_forward.1} parent=43 // pred_check_branch
                %236 = sbr.rel (0) target = $region59
              $region58: #{wav2vec_classifier_forward.1} parent=43 // pred_region
                loop: start=0, step=1, limit=1
                $region60: #{wav2vec_classifier_forward.1} parent=58 // loop_pre_header
                  _
                $region61: #{wav2vec_classifier_forward.1} parent=58 // loop_header
                  %s238 = sphi 0, %s242
                  %p239 = scmp.ge.s32.totalorder %s238, 1
                  %s243 = sphi %s203, %s203
                  %s244 = sphi %s198, %s198
                $region62: #{wav2vec_classifier_forward.1} parent=58 // loop_header_branch
                  %241 = sbr.rel (%p239) target = $region66
                $region63: #{wav2vec_classifier_forward.1} parent=58 // loop_body
                  _
                $region64: #{wav2vec_classifier_forward.1} parent=58 // loop_footer
                  %s242 = sadd.s32 1, %s238
                $region65: #{wav2vec_classifier_forward.1} parent=58 // loop_footer_branch
                  %237 = sbr.rel target = $region61
                $region66: #{wav2vec_classifier_forward.1} parent=58 // loop_exit
                  _
                loop: start=0, step=1, limit=1
                $region67: #{wav2vec_classifier_forward.1} parent=58 // loop_pre_header
                  _
                $region68: #{wav2vec_classifier_forward.1} parent=58 // loop_header
                  %s247 = sphi 0, %s251
                  %p248 = scmp.ge.s32.totalorder %s247, 1
                  %s252 = sphi %s203, %s203
                  %s253 = sphi %s198, %s198
                $region69: #{wav2vec_classifier_forward.1} parent=58 // loop_header_branch
                  %250 = sbr.rel (%p248) target = $region73
                $region70: #{wav2vec_classifier_forward.1} parent=58 // loop_body
                  %v254 = vld [vmem:[%s252] sm:$0xf]
                  %255 = vst [vmem:[%s253] sm:$0xf] %v254
                  %v256 = vld [vmem:[%s252 + $0x8] sm:$0xf]
                  %257 = vst [vmem:[%s253 + $0x4] sm:$0xf] %v256
                  %v258 = vld [vmem:[%s252 + $0x10] sm:$0xf]
                  %259 = vst [vmem:[%s253 + $0x8] sm:$0xf] %v258
                  %v260 = vld [vmem:[%s252 + $0x18] sm:$0xf]
                  %261 = vst [vmem:[%s253 + $0xc] sm:$0xf] %v260
                  %v262 = vld [vmem:[%s252 + $0x20] sm:$0xf]
                  %263 = vst [vmem:[%s253 + $0x10] sm:$0xf] %v262
                  %v264 = vld [vmem:[%s252 + $0x28] sm:$0xf]
                  %265 = vst [vmem:[%s253 + $0x14] sm:$0xf] %v264
                  %v266 = vld [vmem:[%s252 + $0x30] sm:$0xf]
                  %267 = vst [vmem:[%s253 + $0x18] sm:$0xf] %v266
                  %v268 = vld [vmem:[%s252 + $0x38] sm:$0xf]
                  %269 = vst [vmem:[%s253 + $0x1c] sm:$0xf] %v268
                $region71: #{wav2vec_classifier_forward.1} parent=58 // loop_footer
                  %s251 = sadd.s32 1, %s247
                $region72: #{wav2vec_classifier_forward.1} parent=58 // loop_footer_branch
                  %246 = sbr.rel target = $region68
                $region73: #{wav2vec_classifier_forward.1} parent=58 // loop_exit
                  _
              $region59: #{wav2vec_classifier_forward.1} parent=43 // pred_fallthru
                _
            $region44: #{wav2vec_classifier_forward.1} parent=39 // pred_fallthru
              _
            // Predicated region
            $region45: #{wav2vec_classifier_forward.1} parent=39 // pred_check
              _
            $region46: #{wav2vec_classifier_forward.1} parent=39 // pred_check_branch
              %209 = sbr.rel (0) target = $region48
            $region47: #{wav2vec_classifier_forward.1} parent=39 // pred_region
              loop: start=0, step=1, limit=1
              $region49: #{wav2vec_classifier_forward.1} parent=47 // loop_pre_header
                _
              $region50: #{wav2vec_classifier_forward.1} parent=47 // loop_header
                %s212 = sphi 0, %s216
                %p213 = scmp.ge.s32.totalorder %s212, 1
                %s217 = sphi %s203, %s203
                %s218 = sphi %s198, %s198
              $region51: #{wav2vec_classifier_forward.1} parent=47 // loop_header_branch
                %215 = sbr.rel (%p213) target = $region55
              $region52: #{wav2vec_classifier_forward.1} parent=47 // loop_body
                %v219 = vld [vmem:[%s217] sm:$0xf]
                %220 = vst [vmem:[%s218] sm:$0xf] %v219
                %v221 = vld [vmem:[%s217 + $0x8] sm:$0xf]
                %222 = vst [vmem:[%s218 + $0x4] sm:$0xf] %v221
                %v223 = vld [vmem:[%s217 + $0x10] sm:$0xf]
                %224 = vst [vmem:[%s218 + $0x8] sm:$0xf] %v223
                %v225 = vld [vmem:[%s217 + $0x18] sm:$0xf]
                %226 = vst [vmem:[%s218 + $0xc] sm:$0xf] %v225
                %v227 = vld [vmem:[%s217 + $0x20] sm:$0xf]
                %228 = vst [vmem:[%s218 + $0x10] sm:$0xf] %v227
                %v229 = vld [vmem:[%s217 + $0x28] sm:$0xf]
                %230 = vst [vmem:[%s218 + $0x14] sm:$0xf] %v229
                %v231 = vld [vmem:[%s217 + $0x30] sm:$0xf]
                %232 = vst [vmem:[%s218 + $0x18] sm:$0xf] %v231
                %v233 = vld [vmem:[%s217 + $0x38] sm:$0xf]
                %234 = vst [vmem:[%s218 + $0x1c] sm:$0xf] %v233
              $region53: #{wav2vec_classifier_forward.1} parent=47 // loop_footer
                %s216 = sadd.s32 1, %s212
              $region54: #{wav2vec_classifier_forward.1} parent=47 // loop_footer_branch
                %211 = sbr.rel target = $region50
              $region55: #{wav2vec_classifier_forward.1} parent=47 // loop_exit
                _
            $region48: #{wav2vec_classifier_forward.1} parent=39 // pred_fallthru
              _
          $region40: #{wav2vec_classifier_forward.1} parent=35 // pred_fallthru
            _
          %270 = vnop
        $region36: #{wav2vec_classifier_forward.1} parent=31 // pred_fallthru
          _
      $region32: #{wav2vec_classifier_forward.1} parent=5 // pred_fallthru
        _
      %p271 = scmp.le.s32.totalorder 1, %s11
      %p272 = scmp.lt.s32.totalorder %s11, 3
      %p273 = pnand %p271, %p272
      %p274 = pneg %p273
      // Predicated region
      $region74: #{wav2vec_classifier_forward.1} parent=5 // pred_check
        _
      $region75: #{wav2vec_classifier_forward.1} parent=5 // pred_check_branch
        %276 = sbr.rel (%p273) target = $region77
      $region76: #{wav2vec_classifier_forward.1} parent=5 // pred_region
        %s277 = ssub.s32 %s11, 1
        %s278 = sand.u32 %s38, 1
        %s279 = sand.u32 %s38, 1
        %s280 = smul.addr %s279, 32
        %s281 = scalar_lea.vmem [#allocation3], %s280
        // Predicated region
        $region78: #{wav2vec_classifier_forward.1} parent=76 // pred_check
          %p282 = pneg %p51
        $region79: #{wav2vec_classifier_forward.1} parent=76 // pred_check_branch
          %284 = sbr.rel (%p282) target = $region81
        $region80: #{wav2vec_classifier_forward.1} parent=76 // pred_region
          _
        $region81: #{wav2vec_classifier_forward.1} parent=76 // pred_fallthru
          _
        %s285 = sand.u32 %s38, 1
        %s286 = sand.u32 %s38, 1
        %s287 = smul.addr %s286, 32
        %s288 = scalar_lea.vmem [#allocation3], %s287
        %p289 = pneg %p51
        %p290 = pneg %p48
        %p291 = pneg %p72
        %p292 = pneg %p69
        %p293 = pneg %p93
        %p294 = pneg %p90
        %p295 = pneg %p114
        %p296 = pneg %p111
        %p297 = pneg %p135
        %p298 = pneg %p132
        %p299 = pneg %p161
        %p300 = pneg %p158
        %p301 = scmp.lt.s32.totalorder %s20, 0
        %s302 = scalar_select %p301, %s20, 0
        %s303 = smul.addr %s302, 8
        %s304 = scalar_lea.vmem %s5, %s303
        %s305 = smul.u32 8, %s20
        %p306 = scmp.lt.s32.totalorder %s20, 0
        %s307 = scalar_select %p306, %s20, 0
        %s308 = smul.addr %s307, 8
        %s309 = scalar_lea.vmem %s5, %s308
        %p311 = scmp.eq.s32.totalorder %s21, 0
        // Predicated region
        $region82: #{wav2vec_classifier_forward.1} parent=76 // pred_check
          %p312 = pneg %p311
        $region83: #{wav2vec_classifier_forward.1} parent=76 // pred_check_branch
          %314 = sbr.rel (%p312) target = $region85
        $region84: #{wav2vec_classifier_forward.1} parent=76 // pred_region
          %315 = vst [vmem:[#allocation2] sm:$0xff] 0.0
        $region85: #{wav2vec_classifier_forward.1} parent=76 // pred_fallthru
          _
        %v316 = vld [vmem:[#allocation2] sm:$0xff]
        %v317 = vld [vmem:[%s281] sm:$0xf]
        %v318 = vld [vmem:[%s281 + $0x4] sm:$0xf]
        %v319 = vld [vmem:[%s281 + $0x8] sm:$0xf]
        %v320 = vld [vmem:[%s281 + $0xc] sm:$0xf]
        %v321 = vld [vmem:[%s281 + $0x10] sm:$0xf]
        %v322 = vld [vmem:[%s281 + $0x14] sm:$0xf]
        %v323 = vld [vmem:[%s281 + $0x18] sm:$0xf]
        %v324 = vld [vmem:[%s281 + $0x1c] sm:$0xf]
        %v325 = vunpack.c.l.bf16 %v317
        %v326 = vunpack.c.l.bf16 %v318
        %v327 = vunpack.c.l.bf16 %v319
        %v328 = vunpack.c.l.bf16 %v320
        %v329 = vunpack.c.l.bf16 %v321
        %v330 = vunpack.c.l.bf16 %v322
        %v331 = vunpack.c.l.bf16 %v323
        %v332 = vunpack.c.l.bf16 %v324
        %v333 = vrot.slane %v325, 4
        %v334 = vadd.f32 %v325, %v333
        %v335 = vrot.slane %v334, 2
        %v336 = vadd.f32 %v334, %v335
        %v337 = vrot.slane %v336, 1
        %v338 = vadd.f32 %v336, %v337
        %v339 = vrot.slane %v326, 4
        %v340 = vadd.f32 %v326, %v339
        %v341 = vrot.slane %v340, 2
        %v342 = vadd.f32 %v340, %v341
        %v343 = vrot.slane %v342, 1
        %v344 = vadd.f32 %v342, %v343
        %v345 = vrot.slane %v327, 4
        %v346 = vadd.f32 %v327, %v345
        %v347 = vrot.slane %v346, 2
        %v348 = vadd.f32 %v346, %v347
        %v349 = vrot.slane %v348, 1
        %v350 = vadd.f32 %v348, %v349
        %v351 = vrot.slane %v328, 4
        %v352 = vadd.f32 %v328, %v351
        %v353 = vrot.slane %v352, 2
        %v354 = vadd.f32 %v352, %v353
        %v355 = vrot.slane %v354, 1
        %v356 = vadd.f32 %v354, %v355
        %v357 = vrot.slane %v329, 4
        %v358 = vadd.f32 %v329, %v357
        %v359 = vrot.slane %v358, 2
        %v360 = vadd.f32 %v358, %v359
        %v361 = vrot.slane %v360, 1
        %v362 = vadd.f32 %v360, %v361
        %v363 = vrot.slane %v330, 4
        %v364 = vadd.f32 %v330, %v363
        %v365 = vrot.slane %v364, 2
        %v366 = vadd.f32 %v364, %v365
        %v367 = vrot.slane %v366, 1
        %v368 = vadd.f32 %v366, %v367
        %v369 = vrot.slane %v331, 4
        %v370 = vadd.f32 %v331, %v369
        %v371 = vrot.slane %v370, 2
        %v372 = vadd.f32 %v370, %v371
        %v373 = vrot.slane %v372, 1
        %v374 = vadd.f32 %v372, %v373
        %v375 = vrot.slane %v332, 4
        %v376 = vadd.f32 %v332, %v375
        %v377 = vrot.slane %v376, 2
        %v378 = vadd.f32 %v376, %v377
        %v379 = vrot.slane %v378, 1
        %v380 = vadd.f32 %v378, %v379
        %vm389 = vcmask 1041409
        %v390 = vsel %vm389, %v344, %v338
        %vm391 = vcmask 1042434
        %v392 = vsel %vm391, %v350, %v390
        %vm393 = vcmask 1043459
        %v394 = vsel %vm393, %v356, %v392
        %vm395 = vcmask 1044484
        %v396 = vsel %vm395, %v362, %v394
        %vm397 = vcmask 1045509
        %v398 = vsel %vm397, %v368, %v396
        %vm399 = vcmask 1046534
        %v400 = vsel %vm399, %v374, %v398
        %vm401 = vcmask 1047559
        %v402 = vsel %vm401, %v380, %v400
        %v404 = vadd.f32 %v316, %v402
        %405 = vst [vmem:[#allocation2] sm:$0xff] %v404
        %p406 = scmp.eq.s32.totalorder %s21, 1
        // Predicated region
        $region86: #{wav2vec_classifier_forward.1} parent=76 // pred_check
          %p407 = pneg %p406
        $region87: #{wav2vec_classifier_forward.1} parent=76 // pred_check_branch
          %409 = sbr.rel (%p407) target = $region89
        $region88: #{wav2vec_classifier_forward.1} parent=76 // pred_region
          %v410 = vld [vmem:[#allocation2] sm:$0xff]
          %v411 = vmul.f32 %v410, 0.0078125
          %v412 = vpack.c.bf16 %v411, %v411
          %v413 = vld [vmem:[%s1] sm:$0xff]
          %v414 = vld [vmem:[%s1 + $0x8] sm:$0xff]
          %v415 = vld [vmem:[%s1 + $0x10] sm:$0xff]
          %v416 = vld [vmem:[%s1 + $0x18] sm:$0xff]
          %v417 = vld [vmem:[%s1 + $0x20] sm:$0xff]
          %v418 = vld [vmem:[%s1 + $0x28] sm:$0xff]
          %v419 = vld [vmem:[%s1 + $0x30] sm:$0xff]
          %v420 = vld [vmem:[%s1 + $0x38] sm:$0xff]
          %v421 = vld [vmem:[%s1 + $0x40] sm:$0xff]
          %v422 = vld [vmem:[%s1 + $0x48] sm:$0xff]
          %v423 = vld [vmem:[%s1 + $0x50] sm:$0xff]
          %v424 = vld [vmem:[%s1 + $0x58] sm:$0xff]
          %v425 = vld [vmem:[%s1 + $0x60] sm:$0xff]
          %v426 = vld [vmem:[%s1 + $0x68] sm:$0xff]
          %v427 = vld [vmem:[%s1 + $0x70] sm:$0xff]
          %v428 = vld [vmem:[%s1 + $0x78] sm:$0xff]
          %v429 = vld [vmem:[%s2] sm:$0x3]
          %v431 = vlaneseq
          %v432 = vshrl.u32 %v431, 7
          %v433 = vsub.s32 0, %v432
          %v434 = vrot.slane %v429, %v433
          %v435 = vlaneseq
          %v436 = vshrl.u32 %v435, 7
          %v437 = vsub.s32 1, %v436
          %v438 = vrot.slane %v429, %v437
          %v457 = vunpack.c.l.b16 %v413
          %v458 = vunpack.c.h.b16 %v413
          %v459 = vunpack.c.l.b16 %v414
          %v460 = vunpack.c.h.b16 %v414
          %v461 = vunpack.c.l.b16 %v415
          %v462 = vunpack.c.h.b16 %v415
          %v463 = vunpack.c.l.b16 %v416
          %v464 = vunpack.c.h.b16 %v416
          %v465 = vunpack.c.l.b16 %v417
          %v466 = vunpack.c.h.b16 %v417
          %v467 = vunpack.c.l.b16 %v418
          %v468 = vunpack.c.h.b16 %v418
          %v469 = vunpack.c.l.b16 %v419
          %v470 = vunpack.c.h.b16 %v419
          %v471 = vunpack.c.l.b16 %v420
          %v472 = vunpack.c.h.b16 %v420
          %v473 = vunpack.c.l.b16 %v421
          %v474 = vunpack.c.h.b16 %v421
          %v475 = vunpack.c.l.b16 %v422
          %v476 = vunpack.c.h.b16 %v422
          %v477 = vunpack.c.l.b16 %v423
          %v478 = vunpack.c.h.b16 %v423
          %v479 = vunpack.c.l.b16 %v424
          %v480 = vunpack.c.h.b16 %v424
          %v481 = vunpack.c.l.b16 %v425
          %v482 = vunpack.c.h.b16 %v425
          %v483 = vunpack.c.l.b16 %v426
          %v484 = vunpack.c.h.b16 %v426
          %v485 = vunpack.c.l.b16 %v427
          %v486 = vunpack.c.h.b16 %v427
          %v487 = vunpack.c.l.b16 %v428
          %v488 = vunpack.c.h.b16 %v428
          %v489 = vpack.c.b16 %v459, %v457
          %v490 = vpack.c.b16 %v460, %v458
          %v491 = vpack.c.b16 %v463, %v461
          %v492 = vpack.c.b16 %v464, %v462
          %v493 = vpack.c.b16 %v467, %v465
          %v494 = vpack.c.b16 %v468, %v466
          %v495 = vpack.c.b16 %v471, %v469
          %v496 = vpack.c.b16 %v472, %v470
          %v497 = vpack.c.b16 %v475, %v473
          %v498 = vpack.c.b16 %v476, %v474
          %v499 = vpack.c.b16 %v479, %v477
          %v500 = vpack.c.b16 %v480, %v478
          %v501 = vpack.c.b16 %v483, %v481
          %v502 = vpack.c.b16 %v484, %v482
          %v503 = vpack.c.b16 %v487, %v485
          %v504 = vpack.c.b16 %v488, %v486
          %521 = vmatprep.subr.bf16.mxu0 %v490
          %522 = vmatpush1.bf16.msra.mxu0 %v489
          %523 = vmatprep.subr.bf16.mxu0 %v492
          %524 = vmatpush1.bf16.msra.mxu0 %v491
          %525 = vmatprep.subr.bf16.mxu0 %v494
          %526 = vmatpush1.bf16.msra.mxu0 %v493
          %527 = vmatprep.subr.bf16.mxu0 %v496
          %528 = vmatpush1.bf16.msra.mxu0 %v495
          %529 = vmatprep.subr.bf16.mxu0 %v498
          %530 = vmatpush1.bf16.msra.mxu0 %v497
          %531 = vmatprep.subr.bf16.mxu0 %v500
          %532 = vmatpush1.bf16.msra.mxu0 %v499
          %533 = vmatprep.subr.bf16.mxu0 %v502
          %534 = vmatpush1.bf16.msra.mxu0 %v501
          %535 = vmatprep.subr.bf16.mxu0 %v504
          %536 = vmatpush1.bf16.msra.mxu0 %v503
          %537 = vmatprep.subr.bf16.mxu0 0
          %538 = vmatpush1.bf16.msra.mxu0 0
          %539 = vmatprep.subr.bf16.mxu0 0
          %540 = vmatpush1.bf16.msra.mxu0 0
          %541 = vmatprep.subr.bf16.mxu0 0
          %542 = vmatpush1.bf16.msra.mxu0 0
          %543 = vmatprep.subr.bf16.mxu0 0
          %544 = vmatpush1.bf16.msra.mxu0 0
          %545 = vmatprep.subr.bf16.mxu0 0
          %546 = vmatpush1.bf16.msra.mxu0 0
          %547 = vmatprep.subr.bf16.mxu0 0
          %548 = vmatpush1.bf16.msra.mxu0 0
          %549 = vmatprep.subr.bf16.mxu0 0
          %550 = vmatpush1.bf16.msra.mxu0 0
          %551 = vmatprep.subr.bf16.mxu0 0
          %552 = vmatpush1.bf16.msra.mxu0 0
          %553 = vmatprep.mubr.bf16.mxu0 0
          %554 = vmatmul.mubr.bf16.gmra.mrb[0].mxu0 %v412
          %v555 = vpop.f32.mrb[0].mxu0
          %v556 = vadd.f32 %v434, %v555
          %v557 = vpop.f32.mrb[0].mxu0
          %v558 = vadd.f32 %v438, %v557
          %v559 = vpop.f32.mrb[0].mxu0
          %v560 = vpop.f32.mrb[0].mxu0
          %561 = vdwg.mxu0
          %v562 = vmax.f32 %v556, 0.0
          %v563 = vmax.f32 %v558, 0.0
          %v564 = vpack.c.bf16 %v562, %v562
          %v565 = vpack.c.bf16 %v563, %v563
          %v566 = vld [vmem:[%s3] sm:$0xf]
          %v567 = vld [vmem:[%s3 + $0x4] sm:$0xf]
          %v568 = vld [vmem:[%s3 + $0x8] sm:$0xf]
          %v569 = vld [vmem:[%s3 + $0xc] sm:$0xf]
          %v570 = vld [vmem:[%s3 + $0x10] sm:$0xf]
          %v571 = vld [vmem:[%s3 + $0x14] sm:$0xf]
          %v572 = vld [vmem:[%s3 + $0x18] sm:$0xf]
          %v573 = vld [vmem:[%s3 + $0x1c] sm:$0xf]
          %v574 = vld [vmem:[%s3 + $0x20] sm:$0xf]
          %v575 = vld [vmem:[%s3 + $0x24] sm:$0xf]
          %v576 = vld [vmem:[%s3 + $0x28] sm:$0xf]
          %v577 = vld [vmem:[%s3 + $0x2c] sm:$0xf]
          %v578 = vld [vmem:[%s3 + $0x30] sm:$0xf]
          %v579 = vld [vmem:[%s3 + $0x34] sm:$0xf]
          %v580 = vld [vmem:[%s3 + $0x38] sm:$0xf]
          %v581 = vld [vmem:[%s3 + $0x3c] sm:$0xf]
          %v582 = vld [vmem:[%s3 + $0x40] sm:$0xf]
          %v583 = vld [vmem:[%s3 + $0x44] sm:$0xf]
          %v584 = vld [vmem:[%s3 + $0x48] sm:$0xf]
          %v585 = vld [vmem:[%s3 + $0x4c] sm:$0xf]
          %v586 = vld [vmem:[%s3 + $0x50] sm:$0xf]
          %v587 = vld [vmem:[%s3 + $0x54] sm:$0xf]
          %v588 = vld [vmem:[%s3 + $0x58] sm:$0xf]
          %v589 = vld [vmem:[%s3 + $0x5c] sm:$0xf]
          %v590 = vld [vmem:[%s3 + $0x60] sm:$0xf]
          %v591 = vld [vmem:[%s3 + $0x64] sm:$0xf]
          %v592 = vld [vmem:[%s3 + $0x68] sm:$0xf]
          %v593 = vld [vmem:[%s3 + $0x6c] sm:$0xf]
          %v594 = vld [vmem:[%s3 + $0x70] sm:$0xf]
          %v595 = vld [vmem:[%s3 + $0x74] sm:$0xf]
          %v596 = vld [vmem:[%s3 + $0x78] sm:$0xf]
          %v597 = vld [vmem:[%s3 + $0x7c] sm:$0xf]
          %v598 = vld [vmem:[%s4] sm:$0x1]
          %v600 = vlaneseq
          %v601 = vshrl.u32 %v600, 7
          %v602 = vsub.s32 0, %v601
          %v603 = vrot.slane %v598, %v602
          %v637 = vunpack.c.l.b16 %v566
          %v638 = vunpack.c.l.b16 %v567
          %v639 = vunpack.c.l.b16 %v568
          %v640 = vunpack.c.l.b16 %v569
          %v641 = vunpack.c.l.b16 %v570
          %v642 = vunpack.c.l.b16 %v571
          %v643 = vunpack.c.l.b16 %v572
          %v644 = vunpack.c.l.b16 %v573
          %v645 = vunpack.c.l.b16 %v574
          %v646 = vunpack.c.l.b16 %v575
          %v647 = vunpack.c.l.b16 %v576
          %v648 = vunpack.c.l.b16 %v577
          %v649 = vunpack.c.l.b16 %v578
          %v650 = vunpack.c.l.b16 %v579
          %v651 = vunpack.c.l.b16 %v580
          %v652 = vunpack.c.l.b16 %v581
          %v653 = vunpack.c.l.b16 %v582
          %v654 = vunpack.c.l.b16 %v583
          %v655 = vunpack.c.l.b16 %v584
          %v656 = vunpack.c.l.b16 %v585
          %v657 = vunpack.c.l.b16 %v586
          %v658 = vunpack.c.l.b16 %v587
          %v659 = vunpack.c.l.b16 %v588
          %v660 = vunpack.c.l.b16 %v589
          %v661 = vunpack.c.l.b16 %v590
          %v662 = vunpack.c.l.b16 %v591
          %v663 = vunpack.c.l.b16 %v592
          %v664 = vunpack.c.l.b16 %v593
          %v665 = vunpack.c.l.b16 %v594
          %v666 = vunpack.c.l.b16 %v595
          %v667 = vunpack.c.l.b16 %v596
          %v668 = vunpack.c.l.b16 %v597
          %v669 = vpack.c.b16 %v638, %v637
          %v670 = vpack.c.b16 %v640, %v639
          %v671 = vpack.c.b16 %v642, %v641
          %v672 = vpack.c.b16 %v644, %v643
          %v673 = vpack.c.b16 %v646, %v645
          %v674 = vpack.c.b16 %v648, %v647
          %v675 = vpack.c.b16 %v650, %v649
          %v676 = vpack.c.b16 %v652, %v651
          %v677 = vpack.c.b16 %v654, %v653
          %v678 = vpack.c.b16 %v656, %v655
          %v679 = vpack.c.b16 %v658, %v657
          %v680 = vpack.c.b16 %v660, %v659
          %v681 = vpack.c.b16 %v662, %v661
          %v682 = vpack.c.b16 %v664, %v663
          %v683 = vpack.c.b16 %v666, %v665
          %v684 = vpack.c.b16 %v668, %v667
          %701 = vmatprep.subr.bf16.mxu0 0
          %702 = vmatpush1.bf16.msra.mxu0 %v669
          %703 = vmatprep.subr.bf16.mxu0 0
          %704 = vmatpush1.bf16.msra.mxu0 %v670
          %705 = vmatprep.subr.bf16.mxu0 0
          %706 = vmatpush1.bf16.msra.mxu0 %v671
          %707 = vmatprep.subr.bf16.mxu0 0
          %708 = vmatpush1.bf16.msra.mxu0 %v672
          %709 = vmatprep.subr.bf16.mxu0 0
          %710 = vmatpush1.bf16.msra.mxu0 %v673
          %711 = vmatprep.subr.bf16.mxu0 0
          %712 = vmatpush1.bf16.msra.mxu0 %v674
          %713 = vmatprep.subr.bf16.mxu0 0
          %714 = vmatpush1.bf16.msra.mxu0 %v675
          %715 = vmatprep.subr.bf16.mxu0 0
          %716 = vmatpush1.bf16.msra.mxu0 %v676
          %717 = vmatprep.subr.bf16.mxu0 0
          %718 = vmatpush1.bf16.msra.mxu0 %v677
          %719 = vmatprep.subr.bf16.mxu0 0
          %720 = vmatpush1.bf16.msra.mxu0 %v678
          %721 = vmatprep.subr.bf16.mxu0 0
          %722 = vmatpush1.bf16.msra.mxu0 %v679
          %723 = vmatprep.subr.bf16.mxu0 0
          %724 = vmatpush1.bf16.msra.mxu0 %v680
          %725 = vmatprep.subr.bf16.mxu0 0
          %726 = vmatpush1.bf16.msra.mxu0 %v681
          %727 = vmatprep.subr.bf16.mxu0 0
          %728 = vmatpush1.bf16.msra.mxu0 %v682
          %729 = vmatprep.subr.bf16.mxu0 0
          %730 = vmatpush1.bf16.msra.mxu0 %v683
          %731 = vmatprep.subr.bf16.mxu0 0
          %732 = vmatpush1.bf16.msra.mxu0 %v684
          %733 = vmatprep.mubr.bf16.mxu0 %v565
          %734 = vmatmul.mubr.bf16.gmra.mrb[0].mxu0 %v564
          %v735 = vpop.f32.mrb[0].mxu0
          %v736 = vadd.f32 %v603, %v735
          %v737 = vpop.f32.mrb[0].mxu0
          %v738 = vpop.f32.mrb[0].mxu0
          %v739 = vpop.f32.mrb[0].mxu0
          %740 = vdwg.mxu0
          %741 = vst [vmem:[%s309] sm:$0xff] %v736
        $region89: #{wav2vec_classifier_forward.1} parent=76 // pred_fallthru
          _
        %p742 = scmp.lt.s32.totalorder %s20, 0
        %s743 = scalar_select %p742, %s20, 0
        %s744 = smul.addr %s743, 8
        %s745 = scalar_lea.vmem %s5, %s744
        // Predicated region
        $region90: #{wav2vec_classifier_forward.1} parent=76 // pred_check
          %p746 = pneg %p158
        $region91: #{wav2vec_classifier_forward.1} parent=76 // pred_check_branch
          %748 = sbr.rel (%p746) target = $region93
        $region92: #{wav2vec_classifier_forward.1} parent=76 // pred_region
          _
        $region93: #{wav2vec_classifier_forward.1} parent=76 // pred_fallthru
          _
        // Predicated region
        $region94: #{wav2vec_classifier_forward.1} parent=76 // pred_check
          %p749 = pneg %p158
        $region95: #{wav2vec_classifier_forward.1} parent=76 // pred_check_branch
          %751 = sbr.rel (%p749) target = $region97
        $region96: #{wav2vec_classifier_forward.1} parent=76 // pred_region
          %p752 = scmp.lt.s32.totalorder %s20, 0
          %s753 = scalar_select %p752, %s20, 0
          %s754 = smul.addr %s753, 8
          %s755 = scalar_lea.vmem %s5, %s754
        $region97: #{wav2vec_classifier_forward.1} parent=76 // pred_fallthru
          _
      $region77: #{wav2vec_classifier_forward.1} parent=5 // pred_fallthru
        _
      %p756 = scmp.le.s32.totalorder 2, %s11
      // Predicated region
      $region98: #{wav2vec_classifier_forward.1} parent=5 // pred_check
        %p757 = pneg %p756
      $region99: #{wav2vec_classifier_forward.1} parent=5 // pred_check_branch
        %759 = sbr.rel (%p757) target = $region101
      $region100: #{wav2vec_classifier_forward.1} parent=5 // pred_region
        %s760 = ssub.s32 %s11, 2
      $region101: #{wav2vec_classifier_forward.1} parent=5 // pred_fallthru
        _
    $region6: #{wav2vec_classifier_forward.1} parent=1 // loop_footer
      %s15 = sadd.s32 1, %s11
    $region7: #{wav2vec_classifier_forward.1} parent=1 // loop_footer_branch
      %10 = sbr.rel target = $region3
    $region8: #{wav2vec_classifier_forward.1} parent=1 // loop_exit
      _

</llo_original>
